<compile_context>
chip_gen: v6e
topology: v6e:2x2x1
jax: 0.10.0
libtpu: 0.0.40
codegen_flags: <defaults>
</compile_context>

<pallas_src>
import functools
import math

import jax
import jax.numpy as jnp
from jax import lax
from jax.experimental import pallas as pl
from jax.experimental.pallas import tpu as pltpu

# Rough ceiling for the whole-batch-resident fused kernel (keeps the VMEM footprint well
# under v7x's 64 MiB physical VMEM); larger batches fall back to the tiled two-pass path.
_MAX_RESIDENT_BATCH = 4096


def _round_up(x, m):
    return ((x + m - 1) // m) * m


def padded_width(n_latent):
    """Lane-dense width of the packed [mu | lv | pad] block."""
    return _round_up(max(2 * n_latent, 128), 128)


def _vmem_limit(shapes, *, dtype_bytes=4, margin=4, floor=2 << 20, cap=48 << 20):
    """Tight-ish scoped-VMEM request: sum of block bytes with double-buffer margin."""
    total = sum(math.prod(s) for s in shapes) * dtype_bytes
    return int(min(cap, max(floor, margin * total)))


def pack_params(mu_weight, mu_bias, mu_gamma, mu_beta,
                lv_weight, lv_bias, lv_gamma, lv_beta):
    """Pre-pack (ONCE, outside the per-step path) the two Linear + BatchNorm parameter sets
    into a single lane-dense [mu | lv | zero-pad] block of width padded_width(L).

    Weights are [enc_size, n_latent] (transposed vs. torch nn.Linear's [out, in]).
    """
    E, L = mu_weight.shape
    Wp = padded_width(L)
    pad = Wp - 2 * L
    f32 = jnp.float32

    w = jnp.concatenate([mu_weight.astype(f32), lv_weight.astype(f32)], axis=1)
    w = jnp.pad(w, ((0, 0), (0, pad)))                        # (E, Wp)

    def vec(a, b):
        v = jnp.concatenate([a.astype(f32), b.astype(f32)]).reshape(1, 2 * L)
        return jnp.pad(v, ((0, 0), (0, pad)))                 # (1, Wp)

    return {
        "weight": w,
        "bias": vec(mu_bias, lv_bias),
        "gamma": vec(mu_gamma, lv_gamma),
        "beta": vec(mu_beta, lv_beta),
    }


def update_bn_running_stats(batch_mean, batch_var_biased, running_mean, running_var,
                            batch_size, momentum=0.8):
    """PyTorch BatchNorm1d training-mode running-buffer update (unbiased var)."""
    unbias = batch_size / max(batch_size - 1, 1)
    new_mean = (1.0 - momentum) * running_mean + momentum * batch_mean
    new_var = (1.0 - momentum) * running_var + momentum * (batch_var_biased * unbias)
    return new_mean, new_var


# --------------------------------------------------------------------------------------
# Kernel bodies
# --------------------------------------------------------------------------------------

def _bn_sample_softmax_kl(h, mean, var, gamma, beta, eps, u, *, n_latent, dr,
                          prior_var, prior_logvar, bn_eps_mu=1e-4, bn_eps_lv=1e-3):
    """Shared tail: BN(apply) -> reparam sample -> dropout -> softmax ; KL from pre-BN h.

    `h` is the packed pre-BN activation [mu | lv | zero-pad] of shape (rows, Wp).
    Returns (softmax(z) (rows, Wp), KL (rows, 1)).
    """
    rows, Wp = h.shape
    L = n_latent
    col = lax.broadcasted_iota(jnp.int32, (rows, Wp), 1)
    col1 = lax.broadcasted_iota(jnp.int32, (1, Wp), 1)

    # BatchNorm1d (training): biased batch stats, per-half eps (mu: 1e-4, lv: 1e-3).
    bn_eps = jnp.where(col1 < L, bn_eps_mu, bn_eps_lv)
    h_bn = gamma * (h - mean) * lax.rsqrt(var + bn_eps) + beta

    # Align the lv half with the mu half (static lane roll; lane slices+concat on TPU).
    lv_bn = jnp.roll(h_bn, shift=-L, axis=1)

    # Reparameterized sample + inverted dropout (columns >= L are don't-care, masked below).
    z = h_bn + jnp.exp(0.5 * lv_bn) * eps
    if dr > 0.0:
        z = z * jnp.where(u >= dr, 1.0 / (1.0 - dr), 0.0)

    # Softmax over the real latent columns only.
    valid = col < L
    z_m = jnp.where(valid, z, -1e30)
    z_max = jnp.max(z_m, axis=1, keepdims=True)
    ez = jnp.exp(z_m - z_max)
    # TODO(synk): on a Mosaic-only build, pl.reciprocal(denom, approx=True) would move this
    # divide onto the EUP slot; plain division is used here for interpret-backend portability.
    z_soft = ez / jnp.sum(ez, axis=1, keepdims=True)

    # KL(q || logistic-normal prior) from the PRE-BN mu / lv.  As a row-sum it needs no
    # alignment:  sum_j exp(lv_j)/pv + mu_j^2/pv + (log pv - lv_j).
    inv_pv = 1.0 / prior_var
    contrib = jnp.where(valid, h * h * inv_pv, jnp.exp(h) * inv_pv - h)
    contrib = jnp.where(col < 2 * L, contrib, 0.0)
    kl = 0.5 * (jnp.sum(contrib, axis=1, keepdims=True) + L * prior_logvar - L)
    return z_soft, kl


def _fused_kernel(x_ref, w_ref, b_ref, g_ref, beta_ref, eps_ref, u_ref,
                  z_ref, kl_ref, stats_ref, *, n_latent, dr, prior_var, prior_logvar):
    """Single-pass whole-batch-resident kernel (small B)."""
    h = jnp.dot(x_ref[...], w_ref[...], preferred_element_type=jnp.float32,
                precision=lax.Precision.HIGHEST) + b_ref[...]
    mean = jnp.mean(h, axis=0, keepdims=True)
    var = jnp.mean(jnp.square(h - mean), axis=0, keepdims=True)
    stats_ref[...] = jnp.concatenate([mean, var], axis=0)
    z_soft, kl = _bn_sample_softmax_kl(
        h, mean, var, g_ref[...], beta_ref[...], eps_ref[...], u_ref[...],
        n_latent=n_latent, dr=dr, prior_var=prior_var, prior_logvar=prior_logvar)
    z_ref[...] = z_soft
    kl_ref[...] = kl


def _bn_stats_kernel(x_ref, w_ref, b_ref, sums_ref):
    """Pass 1 of the batch-tiled variant: accumulate per-column sum / sum-of-squares."""
    @pl.when(pl.program_id(0) == 0)
    def _init():
        sums_ref[...] = jnp.zeros_like(sums_ref)

    h = jnp.dot(x_ref[...], w_ref[...], preferred_element_type=jnp.float32,
                precision=lax.Precision.HIGHEST) + b_ref[...]
    sums_ref[...] += jnp.concatenate(
        [jnp.sum(h, axis=0, keepdims=True),
         jnp.sum(h * h, axis=0, keepdims=True)], axis=0)


def _bn_apply_kernel(x_ref, w_ref, b_ref, g_ref, beta_ref, stats_ref, eps_ref, u_ref,
                     z_ref, kl_ref, *, n_latent, dr, prior_var, prior_logvar):
    """Pass 2 of the batch-tiled variant: recompute h per tile, apply BN/sample/softmax/KL."""
    h = jnp.dot(x_ref[...], w_ref[...], preferred_element_type=jnp.float32,
                precision=lax.Precision.HIGHEST) + b_ref[...]
    st = stats_ref[...]
    mean = st[0:1, :]
    var = st[1:2, :]
    z_soft, kl = _bn_sample_softmax_kl(
        h, mean, var, g_ref[...], beta_ref[...], eps_ref[...], u_ref[...],
        n_latent=n_latent, dr=dr, prior_var=prior_var, prior_logvar=prior_logvar)
    z_ref[...] = z_soft
    kl_ref[...] = kl


# --------------------------------------------------------------------------------------
# Wrapper
# --------------------------------------------------------------------------------------

def logistic_gaussian_forward(data, params, key, *, n_latent, dr=0.1, alpha=1.0,
                              batch_tile=None):
    """Pallas-backed LogisticGaussianDistribution.forward (training mode).

    data:   [B, enc_size] f32
    params: dict from pack_params (pre-packed once, not per call)
    key:    jax PRNG key (traced; fresh per step) for eps ~ N(0,1) and the dropout mask
    batch_tile: None -> fused single-pass kernel (whole batch VMEM-resident; fine up to a
                few thousand rows, ceiling set by v7x's 64 MiB VMEM).
                int  -> batch-tiled two-pass BN variant for large B (tile >= 256 recommended
                on v6e/v7x, >= 128 on v5e; must divide B).
    Returns (softmax(z) [B, L], KL [B], bn_stats dict with biased batch mean/var per half).
    """
    B, E = data.shape
    L = n_latent
    w, b, g, beta = params["weight"], params["bias"], params["gamma"], params["beta"]
    Wp = w.shape[1]
    f32 = jnp.float32
    data = data.astype(f32)

    prior_var = 1.0 / alpha - 2.0 / L + 1.0 / (L * L)
    prior_logvar = math.log(prior_var)

    # Per-call noise from the (traced) key -> no reuse across jit steps.
    k_eps, k_drop = jax.random.split(key)
    eps = jax.random.normal(k_eps, (B, Wp), f32)
    u = jax.random.uniform(k_drop, (B, Wp), f32)

    if batch_tile is None and B > _MAX_RESIDENT_BATCH:
        for cand in (512, 256, 128, 64, 32, 16, 8):
            if B % cand == 0:
                batch_tile = cand
                break

    common = dict(n_latent=L, dr=float(dr), prior_var=float(prior_var),
                  prior_logvar=float(prior_logvar))

    if batch_tile is None:
        # ---- fused single-pass kernel: whole batch resident, one grid step ----
        vmem = _vmem_limit([(B, E), (E, Wp), (1, Wp), (1, Wp), (1, Wp),
                            (B, Wp), (B, Wp), (B, Wp), (B, 1), (2, Wp)])
        z_p, kl_p, stats = pl.pallas_call(
            functools.partial(_fused_kernel, **common),
            out_shape=(jax.ShapeDtypeStruct((B, Wp), f32),
                       jax.ShapeDtypeStruct((B, 1), f32),
                       jax.ShapeDtypeStruct((2, Wp), f32)),
            grid=(1,),
            in_specs=[
                pl.BlockSpec((B, E), lambda i: (0, 0)),
                pl.BlockSpec((E, Wp), lambda i: (0, 0)),
                pl.BlockSpec((1, Wp), lambda i: (0, 0)),
                pl.BlockSpec((1, Wp), lambda i: (0, 0)),
                pl.BlockSpec((1, Wp), lambda i: (0, 0)),
                pl.BlockSpec((B, Wp), lambda i: (0, 0)),
                pl.BlockSpec((B, Wp), lambda i: (0, 0)),
            ],
            out_specs=(
                pl.BlockSpec((B, Wp), lambda i: (0, 0)),
                pl.BlockSpec((B, 1), lambda i: (0, 0)),
                pl.BlockSpec((2, Wp), lambda i: (0, 0)),
            ),
            compiler_params=pltpu.CompilerParams(
                dimension_semantics=("arbitrary",), vmem_limit_bytes=vmem),
        )(data, w, b, g, beta, eps, u)
    else:
        # ---- batch-tiled two-pass variant (large B / v7x VMEM budget) ----
        bt = int(batch_tile)
        if B % bt != 0:
            raise ValueError(f"batch ({B}) must be divisible by batch_tile ({bt})")
        nb = B // bt

        vmem1 = _vmem_limit([(bt, E), (E, Wp), (1, Wp), (2, Wp)])
        sums = pl.pallas_call(
            _bn_stats_kernel,
            out_shape=jax.ShapeDtypeStruct((2, Wp), f32),
            grid=(nb,),
            in_specs=[pl.BlockSpec((bt, E), lambda i: (i, 0)),
                      pl.BlockSpec((E, Wp), lambda i: (0, 0)),
                      pl.BlockSpec((1, Wp), lambda i: (0, 0))],
            out_specs=pl.BlockSpec((2, Wp), lambda i: (0, 0)),
            compiler_params=pltpu.CompilerParams(
                dimension_semantics=("arbitrary",), vmem_limit_bytes=vmem1),
        )(data, w, b)
        mean = sums[0:1, :] * (1.0 / B)
        var = jnp.maximum(sums[1:2, :] * (1.0 / B) - mean * mean, 0.0)
        stats = jnp.concatenate([mean, var], axis=0)

        vmem2 = _vmem_limit([(bt, E), (E, Wp), (1, Wp), (1, Wp), (1, Wp), (2, Wp),
                             (bt, Wp), (bt, Wp), (bt, Wp), (bt, 1)])
        z_p, kl_p = pl.pallas_call(
            functools.partial(_bn_apply_kernel, **common),
            out_shape=(jax.ShapeDtypeStruct((B, Wp), f32),
                       jax.ShapeDtypeStruct((B, 1), f32)),
            grid=(nb,),
            in_specs=[
                pl.BlockSpec((bt, E), lambda i: (i, 0)),
                pl.BlockSpec((E, Wp), lambda i: (0, 0)),
                pl.BlockSpec((1, Wp), lambda i: (0, 0)),
                pl.BlockSpec((1, Wp), lambda i: (0, 0)),
                pl.BlockSpec((1, Wp), lambda i: (0, 0)),
                pl.BlockSpec((2, Wp), lambda i: (0, 0)),
                pl.BlockSpec((bt, Wp), lambda i: (i, 0)),
                pl.BlockSpec((bt, Wp), lambda i: (i, 0)),
            ],
            out_specs=(
                pl.BlockSpec((bt, Wp), lambda i: (i, 0)),
                pl.BlockSpec((bt, 1), lambda i: (i, 0)),
            ),
            compiler_params=pltpu.CompilerParams(
                dimension_semantics=("parallel",), vmem_limit_bytes=vmem2),
        )(data, w, b, g, beta, stats, eps, u)

    z_soft = z_p[:, :L]
    kl = kl_p[:, 0]
    # Biased batch stats, so the caller can update the BatchNorm1d running buffers
    # (see update_bn_running_stats); the torch module does this as a side effect.
    bn_stats = {"mu_mean": stats[0, :L], "mu_var": stats[1, :L],
                "lv_mean": stats[0, L:2 * L], "lv_var": stats[1, L:2 * L]}
    return z_soft, kl, bn_stats


# --------------------------------------------------------------------------------------
# Self-test
# --------------------------------------------------------------------------------------

if __name__ == "__main__":
    enc_size = 64
    n_latent = 32
    dr = 0.1
    alpha = 1.0

    key = jax.random.PRNGKey(0)
    (k_data1, k_data2, k_mw, k_mb, k_lw, k_lb,
     k_noise1, k_noise2) = jax.random.split(key, 8)

    bound = 1.0 / math.sqrt(enc_size)
    mu_weight = jax.random.uniform(k_mw, (enc_size, n_latent), jnp.float32, -bound, bound)
    mu_bias = jax.random.uniform(k_mb, (n_latent,), jnp.float32, -bound, bound)
    lv_weight = jax.random.uniform(k_lw, (enc_size, n_latent), jnp.float32, -bound, bound)
    lv_bias = jax.random.uniform(k_lb, (n_latent,), jnp.float32, -bound, bound)
    mu_gamma = jnp.ones((n_latent,), jnp.float32)   # BatchNorm1d default affine params
    mu_beta = jnp.zeros((n_latent,), jnp.float32)
    lv_gamma = jnp.ones((n_latent,), jnp.float32)
    lv_beta = jnp.zeros((n_latent,), jnp.float32)

    packed = pack_params(mu_weight, mu_bias, mu_gamma, mu_beta,
                         lv_weight, lv_bias, lv_gamma, lv_beta)
    Wp = packed["weight"].shape[1]
    prior_var = 1.0 / alpha - 2.0 / n_latent + 1.0 / (n_latent * n_latent)
    prior_logvar = math.log(prior_var)

    def reference(data, noise_key):
        """Pure-JAX reference of the torch forward, using the same noise draws."""
        hi = lax.Precision.HIGHEST
        B = data.shape[0]
        k_eps, k_drop = jax.random.split(noise_key)
        eps = jax.random.normal(k_eps, (B, Wp), jnp.float32)[:, :n_latent]
        u = jax.random.uniform(k_drop, (B, Wp), jnp.float32)[:, :n_latent]
        mu = jnp.dot(data, mu_weight, precision=hi) + mu_bias
        lv = jnp.dot(data, lv_weight, precision=hi) + lv_bias

        def bn(x, g, b2, e):
            m = jnp.mean(x, axis=0)
            v = jnp.mean((x - m) ** 2, axis=0)
            return g * (x - m) / jnp.sqrt(v + e) + b2, m, v

        mu_bn, mu_m, mu_v = bn(mu, mu_gamma, mu_beta, 1e-4)
        lv_bn, lv_m, lv_v = bn(lv, lv_gamma, lv_beta, 1e-3)
        z = mu_bn + jnp.exp(0.5 * lv_bn) * eps
        z = z * jnp.where(u >= dr, 1.0 / (1.0 - dr), 0.0)
        z_soft = jax.nn.softmax(z, axis=1)
        kl = 0.5 * (jnp.sum(jnp.exp(lv) / prior_var + mu * mu / prior_var
                            + (prior_logvar - lv), axis=1) - n_latent)
        stats = {"mu_mean": mu_m, "mu_var": mu_v, "lv_mean": lv_m, "lv_var": lv_v}
        return z_soft, kl, stats

    def check(tag, z_soft, kl, bn_stats, data, noise_key):
        B = data.shape[0]
        assert z_soft.shape == (B, n_latent) and kl.shape == (B,), tag
        assert bool(jnp.all(jnp.isfinite(z_soft))) and bool(jnp.all(jnp.isfinite(kl))), tag
        assert bool(jnp.all(z_soft >= 0.0)), tag
        assert bool(jnp.allclose(jnp.sum(z_soft, axis=1), 1.0, atol=1e-4)), tag
        z_r, kl_r, st_r = reference(data, noise_key)
        assert bool(jnp.allclose(z_soft, z_r, atol=5e-3)), tag
        assert bool(jnp.allclose(kl, kl_r, rtol=2e-2, atol=5e-2)), tag
        for name in ("mu_mean", "mu_var", "lv_mean", "lv_var"):
            assert bn_stats[name].shape == (n_latent,), (tag, name)
            assert bool(jnp.allclose(bn_stats[name], st_r[name], atol=5e-3)), (tag, name)

    # --- path 1: fused single-pass kernel (small batch, whole batch VMEM-resident) ---
    B1 = 8
    data1 = jax.random.normal(k_data1, (B1, enc_size), jnp.float32)
    fwd = jax.jit(functools.partial(
        logistic_gaussian_forward, n_latent=n_latent, dr=dr, alpha=alpha))
    z1, kl1, st1 = fwd(data1, packed, k_noise1)
    jax.block_until_ready((z1, kl1))
    check("fused", z1, kl1, st1, data1, k_noise1)

    # BatchNorm running-buffer update from the returned batch stats (momentum=0.8).
    rm, rv = update_bn_running_stats(st1["mu_mean"], st1["mu_var"],
                                     jnp.zeros((n_latent,)), jnp.ones((n_latent,)), B1)
    assert rm.shape == (n_latent,) and rv.shape == (n_latent,)
    assert bool(jnp.all(jnp.isfinite(rm))) and bool(jnp.all(jnp.isfinite(rv)))

    # --- path 2: batch-tiled two-pass variant (large-B / v7x-friendly design, small demo) ---
    B2 = 16
    data2 = jax.random.normal(k_data2, (B2, enc_size), jnp.float32)
    fwd_tiled = jax.jit(functools.partial(
        logistic_gaussian_forward, n_latent=n_latent, dr=dr, alpha=alpha, batch_tile=8))
    z2, kl2, st2 = fwd_tiled(data2, packed, k_noise2)
    jax.block_until_ready((z2, kl2))
    check("tiled", z2, kl2, st2, data2, k_noise2)

    print("KERNEL_OK")
</pallas_src>

<mosaic_0001>
module attributes {stable_mosaic.version = 11 : i64} {
  func.func @_fused_kernel(%arg0: i32, %arg1: memref<8x64xf32, #tpu.memory_space<vmem>>, %arg2: memref<64x128xf32, #tpu.memory_space<vmem>>, %arg3: memref<1x128xf32, #tpu.memory_space<vmem>>, %arg4: memref<1x128xf32, #tpu.memory_space<vmem>>, %arg5: memref<1x128xf32, #tpu.memory_space<vmem>>, %arg6: memref<8x128xf32, #tpu.memory_space<vmem>>, %arg7: memref<8x128xf32, #tpu.memory_space<vmem>>, %arg8: memref<8x128xf32, #tpu.memory_space<vmem>>, %arg9: memref<8x1xf32, #tpu.memory_space<vmem>>, %arg10: memref<2x128xf32, #tpu.memory_space<vmem>>) attributes {dimension_semantics = [#tpu.dimension_semantics<arbitrary>], iteration_bounds = array<i64: 1>, scalar_prefetch = 0 : i64, scratch_operands = 0 : i64, tpu.core_type = #tpu.core_type<tc>, window_params = [{pipeline_mode = #tpu.pipeline_mode<synchronous>, transform_indices = @transform_0, window_bounds = array<i64: 8, 64>}, {pipeline_mode = #tpu.pipeline_mode<synchronous>, transform_indices = @transform_1, window_bounds = array<i64: 64, 128>}, {pipeline_mode = #tpu.pipeline_mode<synchronous>, transform_indices = @transform_2, window_bounds = array<i64: 1, 128>}, {pipeline_mode = #tpu.pipeline_mode<synchronous>, transform_indices = @transform_3, window_bounds = array<i64: 1, 128>}, {pipeline_mode = #tpu.pipeline_mode<synchronous>, transform_indices = @transform_4, window_bounds = array<i64: 1, 128>}, {pipeline_mode = #tpu.pipeline_mode<synchronous>, transform_indices = @transform_5, window_bounds = array<i64: 8, 128>}, {pipeline_mode = #tpu.pipeline_mode<synchronous>, transform_indices = @transform_6, window_bounds = array<i64: 8, 128>}, {pipeline_mode = #tpu.pipeline_mode<synchronous>, transform_indices = @transform_7, window_bounds = array<i64: 8, 128>}, {pipeline_mode = #tpu.pipeline_mode<synchronous>, transform_indices = @transform_8, window_bounds = array<i64: 8, 1>}, {pipeline_mode = #tpu.pipeline_mode<synchronous>, transform_indices = @transform_9, window_bounds = array<i64: 2, 128>}]} {
    %c0 = arith.constant 0 : index
    %c0_0 = arith.constant 0 : index
    %0 = vector.load %arg1[%c0, %c0_0] : memref<8x64xf32, #tpu.memory_space<vmem>>, vector<8x64xf32>
    %c0_1 = arith.constant 0 : index
    %c0_2 = arith.constant 0 : index
    %1 = vector.load %arg2[%c0_1, %c0_2] : memref<64x128xf32, #tpu.memory_space<vmem>>, vector<64x128xf32>
    %cst = arith.constant dense<0.000000e+00> : vector<8x128xf32>
    %2 = tpu.matmul %0, %1, %cst {dimension_numbers = #tpu.dot_dimension_numbers<[1], [0], [0], [1], [0, 0, 1, 1], [], []>, precision = #tpu.contract_precision<fp32>} : vector<8x64xf32>, vector<64x128xf32>, vector<8x128xf32> -> vector<8x128xf32>
    %c0_3 = arith.constant 0 : index
    %c0_4 = arith.constant 0 : index
    %3 = vector.load %arg3[%c0_3, %c0_4] : memref<1x128xf32, #tpu.memory_space<vmem>>, vector<1x128xf32>
    %4 = vector.broadcast %3 : vector<1x128xf32> to vector<8x128xf32>
    %5 = arith.addf %2, %4 : vector<8x128xf32>
    %cst_5 = arith.constant dense<0.000000e+00> : vector<128xf32>
    %6 = vector.multi_reduction <add>, %5, %cst_5 [0] : vector<8x128xf32> to vector<128xf32>
    %7 = vector.shape_cast %6 : vector<128xf32> to vector<1x128xf32>
    %cst_6 = arith.constant 8.000000e+00 : f32
    %8 = vector.broadcast %cst_6 : f32 to vector<1x128xf32>
    %9 = arith.divf %7, %8 : vector<1x128xf32>
    %10 = vector.broadcast %9 : vector<1x128xf32> to vector<8x128xf32>
    %11 = arith.subf %5, %10 : vector<8x128xf32>
    %12 = arith.mulf %11, %11 : vector<8x128xf32>
    %cst_7 = arith.constant dense<0.000000e+00> : vector<128xf32>
    %13 = vector.multi_reduction <add>, %12, %cst_7 [0] : vector<8x128xf32> to vector<128xf32>
    %14 = vector.shape_cast %13 : vector<128xf32> to vector<1x128xf32>
    %cst_8 = arith.constant 8.000000e+00 : f32
    %15 = vector.broadcast %cst_8 : f32 to vector<1x128xf32>
    %16 = arith.divf %14, %15 : vector<1x128xf32>
    %17 = tpu.concatenate %9, %16 in 0 : vector<1x128xf32>, vector<1x128xf32> -> vector<2x128xf32>
    %c0_9 = arith.constant 0 : index
    %c0_10 = arith.constant 0 : index
    %18 = vector.load %arg10[%c0_9, %c0_10] : memref<2x128xf32, #tpu.memory_space<vmem>>, vector<2x128xf32>
    tpu.vector_store %arg10[%c0_9, %c0_10], %17 {strides = array<i32>} : memref<2x128xf32, #tpu.memory_space<vmem>>, vector<2x128xf32>,
    %c0_11 = arith.constant 0 : index
    %c0_12 = arith.constant 0 : index
    %19 = vector.load %arg4[%c0_11, %c0_12] : memref<1x128xf32, #tpu.memory_space<vmem>>, vector<1x128xf32>
    %c0_13 = arith.constant 0 : index
    %c0_14 = arith.constant 0 : index
    %20 = vector.load %arg5[%c0_13, %c0_14] : memref<1x128xf32, #tpu.memory_space<vmem>>, vector<1x128xf32>
    %c0_15 = arith.constant 0 : index
    %c0_16 = arith.constant 0 : index
    %21 = vector.load %arg6[%c0_15, %c0_16] : memref<8x128xf32, #tpu.memory_space<vmem>>, vector<8x128xf32>
    %c0_17 = arith.constant 0 : index
    %c0_18 = arith.constant 0 : index
    %22 = vector.load %arg7[%c0_17, %c0_18] : memref<8x128xf32, #tpu.memory_space<vmem>>, vector<8x128xf32>
    %23 = tpu.iota {dimensions = array<i32: 1>} : vector<8x128xi32>
    %24 = tpu.iota {dimensions = array<i32: 1>} : vector<1x128xi32>
    %c32_i32 = arith.constant 32 : i32
    %25 = vector.broadcast %c32_i32 : i32 to vector<1x128xi32>
    %26 = arith.cmpi slt, %24, %25 : vector<1x128xi32>
    %cst_19 = arith.constant 9.99999974E-5 : f32
    %cst_20 = arith.constant 1.000000e-03 : f32
    %27 = vector.broadcast %cst_19 : f32 to vector<1x128xf32>
    %28 = vector.broadcast %cst_20 : f32 to vector<1x128xf32>
    %29 = arith.select %26, %27, %28 : vector<1x128xi1>, vector<1x128xf32>
    %30 = vector.broadcast %9 : vector<1x128xf32> to vector<8x128xf32>
    %31 = arith.subf %5, %30 : vector<8x128xf32>
    %32 = vector.broadcast %19 : vector<1x128xf32> to vector<8x128xf32>
    %33 = arith.mulf %32, %31 : vector<8x128xf32>
    %34 = arith.addf %16, %29 : vector<1x128xf32>
    %35 = math.rsqrt %34 : vector<1x128xf32>
    %36 = vector.broadcast %35 : vector<1x128xf32> to vector<8x128xf32>
    %37 = arith.mulf %33, %36 : vector<8x128xf32>
    %38 = vector.broadcast %20 : vector<1x128xf32> to vector<8x128xf32>
    %39 = arith.addf %37, %38 : vector<8x128xf32>
    %40 = vector.extract_strided_slice %39 {offsets = [0, 32], sizes = [8, 96], strides = [1, 1]} : vector<8x128xf32> to vector<8x96xf32>
    %41 = vector.extract_strided_slice %39 {offsets = [0, 0], sizes = [8, 32], strides = [1, 1]} : vector<8x128xf32> to vector<8x32xf32>
    %42 = tpu.concatenate %40, %41 in 1 : vector<8x96xf32>, vector<8x32xf32> -> vector<8x128xf32>
    %cst_21 = arith.constant 5.000000e-01 : f32
    %43 = vector.broadcast %cst_21 : f32 to vector<8x128xf32>
    %44 = arith.mulf %43, %42 : vector<8x128xf32>
    %45 = math.exp %44 : vector<8x128xf32>
    %46 = arith.mulf %45, %21 : vector<8x128xf32>
    %47 = arith.addf %39, %46 : vector<8x128xf32>
    %cst_22 = arith.constant 1.000000e-01 : f32
    %48 = vector.broadcast %cst_22 : f32 to vector<8x128xf32>
    %49 = arith.cmpf oge, %22, %48 : vector<8x128xf32>
    %cst_23 = arith.constant 1.11111116 : f32
    %cst_24 = arith.constant 0.000000e+00 : f32
    %50 = vector.broadcast %cst_23 : f32 to vector<8x128xf32>
    %51 = vector.broadcast %cst_24 : f32 to vector<8x128xf32>
    %52 = arith.select %49, %50, %51 : vector<8x128xi1>, vector<8x128xf32>
    %53 = arith.mulf %47, %52 : vector<8x128xf32>
    %c32_i32_25 = arith.constant 32 : i32
    %54 = vector.broadcast %c32_i32_25 : i32 to vector<8x128xi32>
    %55 = arith.cmpi slt, %23, %54 : vector<8x128xi32>
    %cst_26 = arith.constant -1.000000e+30 : f32
    %56 = vector.broadcast %cst_26 : f32 to vector<8x128xf32>
    %57 = arith.select %55, %53, %56 : vector<8x128xi1>, vector<8x128xf32>
    %cst_27 = arith.constant dense<0xFF800000> : vector<8xf32>
    %58 = vector.multi_reduction <maximumf>, %57, %cst_27 [1] : vector<8x128xf32> to vector<8xf32>
    %59 = vector.shape_cast %58 : vector<8xf32> to vector<8x1xf32>
    %60 = vector.broadcast %59 : vector<8x1xf32> to vector<8x128xf32>
    %61 = arith.subf %57, %60 : vector<8x128xf32>
    %62 = math.exp %61 : vector<8x128xf32>
    %cst_28 = arith.constant dense<0.000000e+00> : vector<8xf32>
    %63 = vector.multi_reduction <add>, %62, %cst_28 [1] : vector<8x128xf32> to vector<8xf32>
    %64 = vector.shape_cast %63 : vector<8xf32> to vector<8x1xf32>
    %65 = vector.broadcast %64 : vector<8x1xf32> to vector<8x128xf32>
    %66 = arith.divf %62, %65 : vector<8x128xf32>
    %67 = arith.mulf %5, %5 : vector<8x128xf32>
    %cst_29 = arith.constant 1.06555676 : f32
    %68 = vector.broadcast %cst_29 : f32 to vector<8x128xf32>
    %69 = arith.mulf %67, %68 : vector<8x128xf32>
    %70 = math.exp %5 : vector<8x128xf32>
    %cst_30 = arith.constant 1.06555676 : f32
    %71 = vector.broadcast %cst_30 : f32 to vector<8x128xf32>
    %72 = arith.mulf %70, %71 : vector<8x128xf32>
    %73 = arith.subf %72, %5 : vector<8x128xf32>
    %74 = arith.select %55, %69, %73 : vector<8x128xi1>, vector<8x128xf32>
    %c64_i32 = arith.constant 64 : i32
    %75 = vector.broadcast %c64_i32 : i32 to vector<8x128xi32>
    %76 = arith.cmpi slt, %23, %75 : vector<8x128xi32>
    %cst_31 = arith.constant 0.000000e+00 : f32
    %77 = vector.broadcast %cst_31 : f32 to vector<8x128xf32>
    %78 = arith.select %76, %74, %77 : vector<8x128xi1>, vector<8x128xf32>
    %cst_32 = arith.constant dense<0.000000e+00> : vector<8xf32>
    %79 = vector.multi_reduction <add>, %78, %cst_32 [1] : vector<8x128xf32> to vector<8xf32>
    %80 = vector.shape_cast %79 : vector<8xf32> to vector<8x1xf32>
    %cst_33 = arith.constant -2.03191662 : f32
    %81 = vector.broadcast %cst_33 : f32 to vector<8x1xf32>
    %82 = arith.addf %80, %81 : vector<8x1xf32>
    %cst_34 = arith.constant 3.200000e+01 : f32
    %83 = vector.broadcast %cst_34 : f32 to vector<8x1xf32>
    %84 = arith.subf %82, %83 : vector<8x1xf32>
    %cst_35 = arith.constant 5.000000e-01 : f32
    %85 = vector.broadcast %cst_35 : f32 to vector<8x1xf32>
    %86 = arith.mulf %85, %84 : vector<8x1xf32>
    %c0_36 = arith.constant 0 : index
    %c0_37 = arith.constant 0 : index
    %87 = vector.load %arg8[%c0_36, %c0_37] : memref<8x128xf32, #tpu.memory_space<vmem>>, vector<8x128xf32>
    tpu.vector_store %arg8[%c0_36, %c0_37], %66 {strides = array<i32>} : memref<8x128xf32, #tpu.memory_space<vmem>>, vector<8x128xf32>,
    %c0_38 = arith.constant 0 : index
    %c0_39 = arith.constant 0 : index
    %88 = vector.load %arg9[%c0_38, %c0_39] : memref<8x1xf32, #tpu.memory_space<vmem>>, vector<8x1xf32>
    tpu.vector_store %arg9[%c0_38, %c0_39], %86 {strides = array<i32>} : memref<8x1xf32, #tpu.memory_space<vmem>>, vector<8x1xf32>,
    return
  }
  func.func @transform_0(%arg0: i32) -> (i32, i32) {
    %c0_i32 = arith.constant 0 : i32
    %c0_i32_0 = arith.constant 0 : i32
    %c0_i32_1 = arith.constant 0 : i32
    return %c0_i32, %c0_i32_0 : i32, i32
  }
  func.func @transform_1(%arg0: i32) -> (i32, i32) {
    %c0_i32 = arith.constant 0 : i32
    %c0_i32_0 = arith.constant 0 : i32
    %c0_i32_1 = arith.constant 0 : i32
    return %c0_i32, %c0_i32_0 : i32, i32
  }
  func.func @transform_2(%arg0: i32) -> (i32, i32) {
    %c0_i32 = arith.constant 0 : i32
    %c0_i32_0 = arith.constant 0 : i32
    %c0_i32_1 = arith.constant 0 : i32
    return %c0_i32, %c0_i32_0 : i32, i32
  }
  func.func @transform_3(%arg0: i32) -> (i32, i32) {
    %c0_i32 = arith.constant 0 : i32
    %c0_i32_0 = arith.constant 0 : i32
    %c0_i32_1 = arith.constant 0 : i32
    return %c0_i32, %c0_i32_0 : i32, i32
  }
  func.func @transform_4(%arg0: i32) -> (i32, i32) {
    %c0_i32 = arith.constant 0 : i32
    %c0_i32_0 = arith.constant 0 : i32
    %c0_i32_1 = arith.constant 0 : i32
    return %c0_i32, %c0_i32_0 : i32, i32
  }
  func.func @transform_5(%arg0: i32) -> (i32, i32) {
    %c0_i32 = arith.constant 0 : i32
    %c0_i32_0 = arith.constant 0 : i32
    %c0_i32_1 = arith.constant 0 : i32
    return %c0_i32, %c0_i32_0 : i32, i32
  }
  func.func @transform_6(%arg0: i32) -> (i32, i32) {
    %c0_i32 = arith.constant 0 : i32
    %c0_i32_0 = arith.constant 0 : i32
    %c0_i32_1 = arith.constant 0 : i32
    return %c0_i32, %c0_i32_0 : i32, i32
  }
  func.func @transform_7(%arg0: i32) -> (i32, i32) {
    %c0_i32 = arith.constant 0 : i32
    %c0_i32_0 = arith.constant 0 : i32
    %c0_i32_1 = arith.constant 0 : i32
    return %c0_i32, %c0_i32_0 : i32, i32
  }
  func.func @transform_8(%arg0: i32) -> (i32, i32) {
    %c0_i32 = arith.constant 0 : i32
    %c0_i32_0 = arith.constant 0 : i32
    %c0_i32_1 = arith.constant 0 : i32
    return %c0_i32, %c0_i32_0 : i32, i32
  }
  func.func @transform_9(%arg0: i32) -> (i32, i32) {
    %c0_i32 = arith.constant 0 : i32
    %c0_i32_0 = arith.constant 0 : i32
    %c0_i32_1 = arith.constant 0 : i32
    return %c0_i32, %c0_i32_0 : i32, i32
  }
}

</mosaic_0001>

<llo_original>
// kernel: logistic_gaussian_forward.3
$region0: #{logistic_gaussian_forward.3}
  #allocation0 [shape = 'u32[]', space=smem, size = 0x4, offset = 0x4, fixed_abs, tag = 'smem constant byte address 0x4 - core index']
  #allocation1 [shape = 'u32[144,128]{1,0:T(1,128)}', space=vmem, size = 0x12000, scoped, tag = 'internal scratch']
  %s0 = inlined_call_operand.vmem [shape: f32[8,64], index: 0, kind: input, shape index: {}]
  %s1 = inlined_call_operand.vmem [shape: f32[64,128], index: 1, kind: input, shape index: {}]
  %s2 = inlined_call_operand.vmem [shape: f32[1,128], index: 2, kind: input, shape index: {}]
  %s3 = inlined_call_operand.vmem [shape: f32[1,128], index: 3, kind: input, shape index: {}]
  %s4 = inlined_call_operand.vmem [shape: f32[1,128], index: 4, kind: input, shape index: {}]
  %s5 = inlined_call_operand.vmem [shape: f32[8,128], index: 5, kind: input, shape index: {}]
  %s6 = inlined_call_operand.vmem [shape: f32[8,128], index: 6, kind: input, shape index: {}]
  %s7 = inlined_call_operand.hbm [shape: f32[8,128], index: 7, kind: output, shape index: {0}]
  %s8 = inlined_call_operand.vmem [shape: f32[8,1], index: 8, kind: output, shape index: {1}]
  %s9 = inlined_call_operand.vmem [shape: f32[2,128], index: 9, kind: output, shape index: {2}]
  %10 = xla_tuple %s7, %s8, %s9
  %s11 = sld [smem:[#allocation0]]
  $region54: #{logistic_gaussian_forward.3} parent=0
    _
  %s13 = ssub.s32 1, %s11
  %s14 = scalar_select 0, %s13, %s11
  $region1: #{logistic_gaussian_forward.3} parent=0
    #allocation2 [shape = 'u8[4096]{0}', space=vmem, size = 0x1000, scoped, tag = 'output window, operand 0, single buffered']
    #allocation3 [shape = 's32[1]{0}', space=sflag, size = 0x4, scoped, tag = 'scoped memory for logistic_gaussian_forward.3']
    %15 = vsyncpa [#allocation3], 0
    // Predicated region
    $region2: #{logistic_gaussian_forward.3} parent=1 // pred_check
      _
    $region3: #{logistic_gaussian_forward.3} parent=1 // pred_check_branch
      %17 = sbr.rel (0) target = $region5
    $region4: #{logistic_gaussian_forward.3} parent=1 // pred_region
      _
    $region5: #{logistic_gaussian_forward.3} parent=1 // pred_fallthru
      _
    // Predicated region
    $region6: #{logistic_gaussian_forward.3} parent=1 // pred_check
      _
    $region7: #{logistic_gaussian_forward.3} parent=1 // pred_check_branch
      %19 = sbr.rel (0) target = $region9
    $region8: #{logistic_gaussian_forward.3} parent=1 // pred_region
      _
    $region9: #{logistic_gaussian_forward.3} parent=1 // pred_fallthru
      _
    // Predicated region
    $region10: #{logistic_gaussian_forward.3} parent=1 // pred_check
      _
    $region11: #{logistic_gaussian_forward.3} parent=1 // pred_check_branch
      %21 = sbr.rel (0) target = $region13
    $region12: #{logistic_gaussian_forward.3} parent=1 // pred_region
      _
    $region13: #{logistic_gaussian_forward.3} parent=1 // pred_fallthru
      _
    // Predicated region
    $region14: #{logistic_gaussian_forward.3} parent=1 // pred_check
      _
    $region15: #{logistic_gaussian_forward.3} parent=1 // pred_check_branch
      %23 = sbr.rel (0) target = $region17
    $region16: #{logistic_gaussian_forward.3} parent=1 // pred_region
      _
    $region17: #{logistic_gaussian_forward.3} parent=1 // pred_fallthru
      _
    // Predicated region
    $region18: #{logistic_gaussian_forward.3} parent=1 // pred_check
      _
    $region19: #{logistic_gaussian_forward.3} parent=1 // pred_check_branch
      %25 = sbr.rel (0) target = $region21
    $region20: #{logistic_gaussian_forward.3} parent=1 // pred_region
      _
    $region21: #{logistic_gaussian_forward.3} parent=1 // pred_fallthru
      _
    // Predicated region
    $region22: #{logistic_gaussian_forward.3} parent=1 // pred_check
      _
    $region23: #{logistic_gaussian_forward.3} parent=1 // pred_check_branch
      %27 = sbr.rel (0) target = $region25
    $region24: #{logistic_gaussian_forward.3} parent=1 // pred_region
      _
    $region25: #{logistic_gaussian_forward.3} parent=1 // pred_fallthru
      _
    // Predicated region
    $region26: #{logistic_gaussian_forward.3} parent=1 // pred_check
      _
    $region27: #{logistic_gaussian_forward.3} parent=1 // pred_check_branch
      %29 = sbr.rel (0) target = $region29
    $region28: #{logistic_gaussian_forward.3} parent=1 // pred_region
      _
    $region29: #{logistic_gaussian_forward.3} parent=1 // pred_fallthru
      _
    %v30 = vld [vmem:[%s0] sm:$0xff]
    %v31 = vld [vmem:[%s1] sm:$0xff]
    %v32 = vld [vmem:[%s1 + $0x8] sm:$0xff]
    %v33 = vld [vmem:[%s1 + $0x10] sm:$0xff]
    %v34 = vld [vmem:[%s1 + $0x18] sm:$0xff]
    %v35 = vld [vmem:[%s1 + $0x20] sm:$0xff]
    %v36 = vld [vmem:[%s1 + $0x28] sm:$0xff]
    %v37 = vld [vmem:[%s1 + $0x30] sm:$0xff]
    %v38 = vld [vmem:[%s1 + $0x38] sm:$0xff]
    %v39 = vld [vmem:[%s2] sm:$0x1]
    %v41 = vlaneseq
    %v42 = vshrl.u32 %v41, 7
    %v43 = vsub.s32 0, %v42
    %v44 = vrot.slane %v39, %v43
    %vm46 = vcmask 523264
    %v48 = vsel %vm46, %v30, 0
    %50 = vmatprep.subr.mxu0 0.0
    %51 = vmatpush1.msra.mxu0 0.0
    %52 = vmatprep.subr.mxu0 0.0
    %53 = vmatpush1.msra.mxu0 0.0
    %54 = vmatprep.subr.mxu0 0.0
    %55 = vmatpush1.msra.mxu0 0.0
    %56 = vmatprep.subr.mxu0 0.0
    %57 = vmatpush1.msra.mxu0 0.0
    %58 = vmatprep.subr.mxu0 0.0
    %59 = vmatpush1.msra.mxu0 0.0
    %60 = vmatprep.subr.mxu0 0.0
    %61 = vmatpush1.msra.mxu0 0.0
    %62 = vmatprep.subr.mxu0 0.0
    %63 = vmatpush1.msra.mxu0 0.0
    %64 = vmatprep.subr.mxu0 0.0
    %65 = vmatpush1.msra.mxu0 0.0
    %66 = vmatprep.subr.mxu0 0.0
    %v67 = vand.u32 %v38, 4294901760
    %68 = vmatpush1.msra.mxu0 %v67
    %69 = vmatprep.subr.mxu0 0.0
    %v70 = vand.u32 %v37, 4294901760
    %71 = vmatpush1.msra.mxu0 %v70
    %72 = vmatprep.subr.mxu0 0.0
    %v73 = vand.u32 %v36, 4294901760
    %74 = vmatpush1.msra.mxu0 %v73
    %75 = vmatprep.subr.mxu0 0.0
    %v76 = vand.u32 %v35, 4294901760
    %77 = vmatpush1.msra.mxu0 %v76
    %78 = vmatprep.subr.mxu0 0.0
    %v79 = vand.u32 %v34, 4294901760
    %80 = vmatpush1.msra.mxu0 %v79
    %81 = vmatprep.subr.mxu0 0.0
    %v82 = vand.u32 %v33, 4294901760
    %83 = vmatpush1.msra.mxu0 %v82
    %84 = vmatprep.subr.mxu0 0.0
    %v85 = vand.u32 %v32, 4294901760
    %86 = vmatpush1.msra.mxu0 %v85
    %87 = vmatprep.subr.mxu0 0.0
    %v88 = vand.u32 %v31, 4294901760
    %89 = vmatpush1.msra.mxu0 %v88
    %90 = vmatprep.subr.mxu0 0.0
    %91 = vmatpush2.msra.mxu0 0.0
    %92 = vmatprep.subr.mxu0 0.0
    %93 = vmatpush2.msra.mxu0 0.0
    %94 = vmatprep.subr.mxu0 0.0
    %95 = vmatpush2.msra.mxu0 0.0
    %96 = vmatprep.subr.mxu0 0.0
    %97 = vmatpush2.msra.mxu0 0.0
    %98 = vmatprep.subr.mxu0 0.0
    %99 = vmatpush2.msra.mxu0 0.0
    %100 = vmatprep.subr.mxu0 0.0
    %101 = vmatpush2.msra.mxu0 0.0
    %102 = vmatprep.subr.mxu0 0.0
    %103 = vmatpush2.msra.mxu0 0.0
    %104 = vmatprep.subr.mxu0 0.0
    %105 = vmatpush2.msra.mxu0 0.0
    %106 = vmatprep.subr.mxu0 0.0
    %107 = vmatpush2.msra.mxu0 0.0
    %108 = vmatprep.subr.mxu0 0.0
    %109 = vmatpush2.msra.mxu0 0.0
    %110 = vmatprep.subr.mxu0 0.0
    %111 = vmatpush2.msra.mxu0 0.0
    %112 = vmatprep.subr.mxu0 0.0
    %113 = vmatpush2.msra.mxu0 0.0
    %114 = vmatprep.subr.mxu0 0.0
    %115 = vmatpush2.msra.mxu0 0.0
    %116 = vmatprep.subr.mxu0 0.0
    %117 = vmatpush2.msra.mxu0 0.0
    %118 = vmatprep.subr.mxu0 0.0
    %119 = vmatpush2.msra.mxu0 0.0
    %120 = vmatprep.subr.mxu0 0.0
    %121 = vmatpush2.msra.mxu0 0.0
    %122 = vmatprep.mubr.f32.mxu0 0.0
    %v123 = vand.u32 %v48, 4294901760
    %v124 = vsub.f32 %v48, %v123
    %v125 = vand.u32 %v124, 4294901760
    %v126 = vsub.f32 %v124, %v125
    %v127 = vand.u32 %v126, 4294901760
    %128 = vmatmul.mubr.f32.gmra.mxu0 %v127
    %v129 = vpop.f32.mrf.mxu0
    %v130 = vadd.f32 %v44, %v129
    %v131 = vpop.f32.mrf.mxu0
    %132 = vdwg.mxu0
    %133 = vmatprep.subr.mxu0 0.0
    %134 = vmatpush1.msra.mxu0 0.0
    %135 = vmatprep.subr.mxu0 0.0
    %136 = vmatpush1.msra.mxu0 0.0
    %137 = vmatprep.subr.mxu0 0.0
    %138 = vmatpush1.msra.mxu0 0.0
    %139 = vmatprep.subr.mxu0 0.0
    %140 = vmatpush1.msra.mxu0 0.0
    %141 = vmatprep.subr.mxu0 0.0
    %142 = vmatpush1.msra.mxu0 0.0
    %143 = vmatprep.subr.mxu0 0.0
    %144 = vmatpush1.msra.mxu0 0.0
    %145 = vmatprep.subr.mxu0 0.0
    %146 = vmatpush1.msra.mxu0 0.0
    %147 = vmatprep.subr.mxu0 0.0
    %148 = vmatpush1.msra.mxu0 0.0
    %149 = vmatprep.subr.mxu0 0.0
    %v150 = vand.u32 %v38, 4294901760
    %v151 = vsub.f32 %v38, %v150
    %v152 = vand.u32 %v151, 4294901760
    %v153 = vsub.f32 %v151, %v152
    %v154 = vand.u32 %v153, 4294901760
    %155 = vmatpush1.msra.mxu0 %v154
    %156 = vmatprep.subr.mxu0 0.0
    %v157 = vand.u32 %v37, 4294901760
    %v158 = vsub.f32 %v37, %v157
    %v159 = vand.u32 %v158, 4294901760
    %v160 = vsub.f32 %v158, %v159
    %v161 = vand.u32 %v160, 4294901760
    %162 = vmatpush1.msra.mxu0 %v161
    %163 = vmatprep.subr.mxu0 0.0
    %v164 = vand.u32 %v36, 4294901760
    %v165 = vsub.f32 %v36, %v164
    %v166 = vand.u32 %v165, 4294901760
    %v167 = vsub.f32 %v165, %v166
    %v168 = vand.u32 %v167, 4294901760
    %169 = vmatpush1.msra.mxu0 %v168
    %170 = vmatprep.subr.mxu0 0.0
    %v171 = vand.u32 %v35, 4294901760
    %v172 = vsub.f32 %v35, %v171
    %v173 = vand.u32 %v172, 4294901760
    %v174 = vsub.f32 %v172, %v173
    %v175 = vand.u32 %v174, 4294901760
    %176 = vmatpush1.msra.mxu0 %v175
    %177 = vmatprep.subr.mxu0 0.0
    %v178 = vand.u32 %v34, 4294901760
    %v179 = vsub.f32 %v34, %v178
    %v180 = vand.u32 %v179, 4294901760
    %v181 = vsub.f32 %v179, %v180
    %v182 = vand.u32 %v181, 4294901760
    %183 = vmatpush1.msra.mxu0 %v182
    %184 = vmatprep.subr.mxu0 0.0
    %v185 = vand.u32 %v33, 4294901760
    %v186 = vsub.f32 %v33, %v185
    %v187 = vand.u32 %v186, 4294901760
    %v188 = vsub.f32 %v186, %v187
    %v189 = vand.u32 %v188, 4294901760
    %190 = vmatpush1.msra.mxu0 %v189
    %191 = vmatprep.subr.mxu0 0.0
    %v192 = vand.u32 %v32, 4294901760
    %v193 = vsub.f32 %v32, %v192
    %v194 = vand.u32 %v193, 4294901760
    %v195 = vsub.f32 %v193, %v194
    %v196 = vand.u32 %v195, 4294901760
    %197 = vmatpush1.msra.mxu0 %v196
    %198 = vmatprep.subr.mxu0 0.0
    %v199 = vand.u32 %v31, 4294901760
    %v200 = vsub.f32 %v31, %v199
    %v201 = vand.u32 %v200, 4294901760
    %v202 = vsub.f32 %v200, %v201
    %v203 = vand.u32 %v202, 4294901760
    %204 = vmatpush1.msra.mxu0 %v203
    %205 = vmatprep.subr.mxu0 0.0
    %206 = vmatpush2.msra.mxu0 0.0
    %207 = vmatprep.subr.mxu0 0.0
    %208 = vmatpush2.msra.mxu0 0.0
    %209 = vmatprep.subr.mxu0 0.0
    %210 = vmatpush2.msra.mxu0 0.0
    %211 = vmatprep.subr.mxu0 0.0
    %212 = vmatpush2.msra.mxu0 0.0
    %213 = vmatprep.subr.mxu0 0.0
    %214 = vmatpush2.msra.mxu0 0.0
    %215 = vmatprep.subr.mxu0 0.0
    %216 = vmatpush2.msra.mxu0 0.0
    %217 = vmatprep.subr.mxu0 0.0
    %218 = vmatpush2.msra.mxu0 0.0
    %219 = vmatprep.subr.mxu0 0.0
    %220 = vmatpush2.msra.mxu0 0.0
    %221 = vmatprep.subr.mxu0 0.0
    %222 = vmatpush2.msra.mxu0 0.0
    %223 = vmatprep.subr.mxu0 0.0
    %224 = vmatpush2.msra.mxu0 0.0
    %225 = vmatprep.subr.mxu0 0.0
    %226 = vmatpush2.msra.mxu0 0.0
    %227 = vmatprep.subr.mxu0 0.0
    %228 = vmatpush2.msra.mxu0 0.0
    %229 = vmatprep.subr.mxu0 0.0
    %230 = vmatpush2.msra.mxu0 0.0
    %231 = vmatprep.subr.mxu0 0.0
    %232 = vmatpush2.msra.mxu0 0.0
    %233 = vmatprep.subr.mxu0 0.0
    %234 = vmatpush2.msra.mxu0 0.0
    %235 = vmatprep.subr.mxu0 0.0
    %236 = vmatpush2.msra.mxu0 0.0
    %237 = vmatprep.mubr.f32.mxu0 0.0
    %v238 = vand.u32 %v48, 4294901760
    %239 = vmatmul.mubr.f32.gmra.mxu0 %v238
    %v240 = vpop.f32.mrf.mxu0
    %v241 = vadd.f32 %v130, %v240
    %v242 = vpop.f32.mrf.mxu0
    %243 = vdwg.mxu0
    %244 = vmatprep.subr.mxu0 0.0
    %245 = vmatpush1.msra.mxu0 0.0
    %246 = vmatprep.subr.mxu0 0.0
    %247 = vmatpush1.msra.mxu0 0.0
    %248 = vmatprep.subr.mxu0 0.0
    %249 = vmatpush1.msra.mxu0 0.0
    %250 = vmatprep.subr.mxu0 0.0
    %251 = vmatpush1.msra.mxu0 0.0
    %252 = vmatprep.subr.mxu0 0.0
    %253 = vmatpush1.msra.mxu0 0.0
    %254 = vmatprep.subr.mxu0 0.0
    %255 = vmatpush1.msra.mxu0 0.0
    %256 = vmatprep.subr.mxu0 0.0
    %257 = vmatpush1.msra.mxu0 0.0
    %258 = vmatprep.subr.mxu0 0.0
    %259 = vmatpush1.msra.mxu0 0.0
    %260 = vmatprep.subr.mxu0 0.0
    %v261 = vand.u32 %v38, 4294901760
    %v262 = vsub.f32 %v38, %v261
    %263 = vmatpush1.msra.mxu0 %v262
    %264 = vmatprep.subr.mxu0 0.0
    %v265 = vand.u32 %v37, 4294901760
    %v266 = vsub.f32 %v37, %v265
    %267 = vmatpush1.msra.mxu0 %v266
    %268 = vmatprep.subr.mxu0 0.0
    %v269 = vand.u32 %v36, 4294901760
    %v270 = vsub.f32 %v36, %v269
    %271 = vmatpush1.msra.mxu0 %v270
    %272 = vmatprep.subr.mxu0 0.0
    %v273 = vand.u32 %v35, 4294901760
    %v274 = vsub.f32 %v35, %v273
    %275 = vmatpush1.msra.mxu0 %v274
    %276 = vmatprep.subr.mxu0 0.0
    %v277 = vand.u32 %v34, 4294901760
    %v278 = vsub.f32 %v34, %v277
    %279 = vmatpush1.msra.mxu0 %v278
    %280 = vmatprep.subr.mxu0 0.0
    %v281 = vand.u32 %v33, 4294901760
    %v282 = vsub.f32 %v33, %v281
    %283 = vmatpush1.msra.mxu0 %v282
    %284 = vmatprep.subr.mxu0 0.0
    %v285 = vand.u32 %v32, 4294901760
    %v286 = vsub.f32 %v32, %v285
    %287 = vmatpush1.msra.mxu0 %v286
    %288 = vmatprep.subr.mxu0 0.0
    %v289 = vand.u32 %v31, 4294901760
    %v290 = vsub.f32 %v31, %v289
    %291 = vmatpush1.msra.mxu0 %v290
    %292 = vmatprep.subr.mxu0 0.0
    %293 = vmatpush2.msra.mxu0 0.0
    %294 = vmatprep.subr.mxu0 0.0
    %295 = vmatpush2.msra.mxu0 0.0
    %296 = vmatprep.subr.mxu0 0.0
    %297 = vmatpush2.msra.mxu0 0.0
    %298 = vmatprep.subr.mxu0 0.0
    %299 = vmatpush2.msra.mxu0 0.0
    %300 = vmatprep.subr.mxu0 0.0
    %301 = vmatpush2.msra.mxu0 0.0
    %302 = vmatprep.subr.mxu0 0.0
    %303 = vmatpush2.msra.mxu0 0.0
    %304 = vmatprep.subr.mxu0 0.0
    %305 = vmatpush2.msra.mxu0 0.0
    %306 = vmatprep.subr.mxu0 0.0
    %307 = vmatpush2.msra.mxu0 0.0
    %308 = vmatprep.subr.mxu0 0.0
    %309 = vmatpush2.msra.mxu0 0.0
    %310 = vmatprep.subr.mxu0 0.0
    %311 = vmatpush2.msra.mxu0 0.0
    %312 = vmatprep.subr.mxu0 0.0
    %313 = vmatpush2.msra.mxu0 0.0
    %314 = vmatprep.subr.mxu0 0.0
    %315 = vmatpush2.msra.mxu0 0.0
    %316 = vmatprep.subr.mxu0 0.0
    %317 = vmatpush2.msra.mxu0 0.0
    %318 = vmatprep.subr.mxu0 0.0
    %319 = vmatpush2.msra.mxu0 0.0
    %320 = vmatprep.subr.mxu0 0.0
    %321 = vmatpush2.msra.mxu0 0.0
    %322 = vmatprep.subr.mxu0 0.0
    %323 = vmatpush2.msra.mxu0 0.0
    %324 = vmatprep.mubr.f32.mxu0 0.0
    %v325 = vand.u32 %v48, 4294901760
    %v326 = vsub.f32 %v48, %v325
    %327 = vmatmul.mubr.f32.gmra.mxu0 %v326
    %v328 = vpop.f32.mrf.mxu0
    %v329 = vadd.f32 %v241, %v328
    %v330 = vpop.f32.mrf.mxu0
    %331 = vdwg.mxu0
    %332 = vmatprep.subr.mxu0 0.0
    %333 = vmatpush1.msra.mxu0 0.0
    %334 = vmatprep.subr.mxu0 0.0
    %335 = vmatpush1.msra.mxu0 0.0
    %336 = vmatprep.subr.mxu0 0.0
    %337 = vmatpush1.msra.mxu0 0.0
    %338 = vmatprep.subr.mxu0 0.0
    %339 = vmatpush1.msra.mxu0 0.0
    %340 = vmatprep.subr.mxu0 0.0
    %341 = vmatpush1.msra.mxu0 0.0
    %342 = vmatprep.subr.mxu0 0.0
    %343 = vmatpush1.msra.mxu0 0.0
    %344 = vmatprep.subr.mxu0 0.0
    %345 = vmatpush1.msra.mxu0 0.0
    %346 = vmatprep.subr.mxu0 0.0
    %347 = vmatpush1.msra.mxu0 0.0
    %348 = vmatprep.subr.mxu0 0.0
    %v349 = vand.u32 %v38, 4294901760
    %350 = vmatpush1.msra.mxu0 %v349
    %351 = vmatprep.subr.mxu0 0.0
    %v352 = vand.u32 %v37, 4294901760
    %353 = vmatpush1.msra.mxu0 %v352
    %354 = vmatprep.subr.mxu0 0.0
    %v355 = vand.u32 %v36, 4294901760
    %356 = vmatpush1.msra.mxu0 %v355
    %357 = vmatprep.subr.mxu0 0.0
    %v358 = vand.u32 %v35, 4294901760
    %359 = vmatpush1.msra.mxu0 %v358
    %360 = vmatprep.subr.mxu0 0.0
    %v361 = vand.u32 %v34, 4294901760
    %362 = vmatpush1.msra.mxu0 %v361
    %363 = vmatprep.subr.mxu0 0.0
    %v364 = vand.u32 %v33, 4294901760
    %365 = vmatpush1.msra.mxu0 %v364
    %366 = vmatprep.subr.mxu0 0.0
    %v367 = vand.u32 %v32, 4294901760
    %368 = vmatpush1.msra.mxu0 %v367
    %369 = vmatprep.subr.mxu0 0.0
    %v370 = vand.u32 %v31, 4294901760
    %371 = vmatpush1.msra.mxu0 %v370
    %372 = vmatprep.subr.mxu0 0.0
    %373 = vmatpush2.msra.mxu0 0.0
    %374 = vmatprep.subr.mxu0 0.0
    %375 = vmatpush2.msra.mxu0 0.0
    %376 = vmatprep.subr.mxu0 0.0
    %377 = vmatpush2.msra.mxu0 0.0
    %378 = vmatprep.subr.mxu0 0.0
    %379 = vmatpush2.msra.mxu0 0.0
    %380 = vmatprep.subr.mxu0 0.0
    %381 = vmatpush2.msra.mxu0 0.0
    %382 = vmatprep.subr.mxu0 0.0
    %383 = vmatpush2.msra.mxu0 0.0
    %384 = vmatprep.subr.mxu0 0.0
    %385 = vmatpush2.msra.mxu0 0.0
    %386 = vmatprep.subr.mxu0 0.0
    %387 = vmatpush2.msra.mxu0 0.0
    %388 = vmatprep.subr.mxu0 0.0
    %389 = vmatpush2.msra.mxu0 0.0
    %390 = vmatprep.subr.mxu0 0.0
    %391 = vmatpush2.msra.mxu0 0.0
    %392 = vmatprep.subr.mxu0 0.0
    %393 = vmatpush2.msra.mxu0 0.0
    %394 = vmatprep.subr.mxu0 0.0
    %395 = vmatpush2.msra.mxu0 0.0
    %396 = vmatprep.subr.mxu0 0.0
    %397 = vmatpush2.msra.mxu0 0.0
    %398 = vmatprep.subr.mxu0 0.0
    %399 = vmatpush2.msra.mxu0 0.0
    %400 = vmatprep.subr.mxu0 0.0
    %401 = vmatpush2.msra.mxu0 0.0
    %402 = vmatprep.subr.mxu0 0.0
    %403 = vmatpush2.msra.mxu0 0.0
    %404 = vmatprep.mubr.f32.mxu0 0.0
    %v405 = vand.u32 %v48, 4294901760
    %v406 = vsub.f32 %v48, %v405
    %v407 = vand.u32 %v406, 4294901760
    %408 = vmatmul.mubr.f32.gmra.mxu0 %v407
    %v409 = vpop.f32.mrf.mxu0
    %v410 = vadd.f32 %v329, %v409
    %v411 = vpop.f32.mrf.mxu0
    %412 = vdwg.mxu0
    %413 = vmatprep.subr.mxu0 0.0
    %414 = vmatpush1.msra.mxu0 0.0
    %415 = vmatprep.subr.mxu0 0.0
    %416 = vmatpush1.msra.mxu0 0.0
    %417 = vmatprep.subr.mxu0 0.0
    %418 = vmatpush1.msra.mxu0 0.0
    %419 = vmatprep.subr.mxu0 0.0
    %420 = vmatpush1.msra.mxu0 0.0
    %421 = vmatprep.subr.mxu0 0.0
    %422 = vmatpush1.msra.mxu0 0.0
    %423 = vmatprep.subr.mxu0 0.0
    %424 = vmatpush1.msra.mxu0 0.0
    %425 = vmatprep.subr.mxu0 0.0
    %426 = vmatpush1.msra.mxu0 0.0
    %427 = vmatprep.subr.mxu0 0.0
    %428 = vmatpush1.msra.mxu0 0.0
    %429 = vmatprep.subr.mxu0 0.0
    %v430 = vand.u32 %v38, 4294901760
    %v431 = vsub.f32 %v38, %v430
    %v432 = vand.u32 %v431, 4294901760
    %433 = vmatpush1.msra.mxu0 %v432
    %434 = vmatprep.subr.mxu0 0.0
    %v435 = vand.u32 %v37, 4294901760
    %v436 = vsub.f32 %v37, %v435
    %v437 = vand.u32 %v436, 4294901760
    %438 = vmatpush1.msra.mxu0 %v437
    %439 = vmatprep.subr.mxu0 0.0
    %v440 = vand.u32 %v36, 4294901760
    %v441 = vsub.f32 %v36, %v440
    %v442 = vand.u32 %v441, 4294901760
    %443 = vmatpush1.msra.mxu0 %v442
    %444 = vmatprep.subr.mxu0 0.0
    %v445 = vand.u32 %v35, 4294901760
    %v446 = vsub.f32 %v35, %v445
    %v447 = vand.u32 %v446, 4294901760
    %448 = vmatpush1.msra.mxu0 %v447
    %449 = vmatprep.subr.mxu0 0.0
    %v450 = vand.u32 %v34, 4294901760
    %v451 = vsub.f32 %v34, %v450
    %v452 = vand.u32 %v451, 4294901760
    %453 = vmatpush1.msra.mxu0 %v452
    %454 = vmatprep.subr.mxu0 0.0
    %v455 = vand.u32 %v33, 4294901760
    %v456 = vsub.f32 %v33, %v455
    %v457 = vand.u32 %v456, 4294901760
    %458 = vmatpush1.msra.mxu0 %v457
    %459 = vmatprep.subr.mxu0 0.0
    %v460 = vand.u32 %v32, 4294901760
    %v461 = vsub.f32 %v32, %v460
    %v462 = vand.u32 %v461, 4294901760
    %463 = vmatpush1.msra.mxu0 %v462
    %464 = vmatprep.subr.mxu0 0.0
    %v465 = vand.u32 %v31, 4294901760
    %v466 = vsub.f32 %v31, %v465
    %v467 = vand.u32 %v466, 4294901760
    %468 = vmatpush1.msra.mxu0 %v467
    %469 = vmatprep.subr.mxu0 0.0
    %470 = vmatpush2.msra.mxu0 0.0
    %471 = vmatprep.subr.mxu0 0.0
    %472 = vmatpush2.msra.mxu0 0.0
    %473 = vmatprep.subr.mxu0 0.0
    %474 = vmatpush2.msra.mxu0 0.0
    %475 = vmatprep.subr.mxu0 0.0
    %476 = vmatpush2.msra.mxu0 0.0
    %477 = vmatprep.subr.mxu0 0.0
    %478 = vmatpush2.msra.mxu0 0.0
    %479 = vmatprep.subr.mxu0 0.0
    %480 = vmatpush2.msra.mxu0 0.0
    %481 = vmatprep.subr.mxu0 0.0
    %482 = vmatpush2.msra.mxu0 0.0
    %483 = vmatprep.subr.mxu0 0.0
    %484 = vmatpush2.msra.mxu0 0.0
    %485 = vmatprep.subr.mxu0 0.0
    %486 = vmatpush2.msra.mxu0 0.0
    %487 = vmatprep.subr.mxu0 0.0
    %488 = vmatpush2.msra.mxu0 0.0
    %489 = vmatprep.subr.mxu0 0.0
    %490 = vmatpush2.msra.mxu0 0.0
    %491 = vmatprep.subr.mxu0 0.0
    %492 = vmatpush2.msra.mxu0 0.0
    %493 = vmatprep.subr.mxu0 0.0
    %494 = vmatpush2.msra.mxu0 0.0
    %495 = vmatprep.subr.mxu0 0.0
    %496 = vmatpush2.msra.mxu0 0.0
    %497 = vmatprep.subr.mxu0 0.0
    %498 = vmatpush2.msra.mxu0 0.0
    %499 = vmatprep.subr.mxu0 0.0
    %500 = vmatpush2.msra.mxu0 0.0
    %501 = vmatprep.mubr.f32.mxu0 0.0
    %v502 = vand.u32 %v48, 4294901760
    %503 = vmatmul.mubr.f32.gmra.mxu0 %v502
    %v504 = vpop.f32.mrf.mxu0
    %v505 = vadd.f32 %v410, %v504
    %v506 = vpop.f32.mrf.mxu0
    %507 = vdwg.mxu0
    %508 = vmatprep.subr.mxu0 0.0
    %509 = vmatpush1.msra.mxu0 0.0
    %510 = vmatprep.subr.mxu0 0.0
    %511 = vmatpush1.msra.mxu0 0.0
    %512 = vmatprep.subr.mxu0 0.0
    %513 = vmatpush1.msra.mxu0 0.0
    %514 = vmatprep.subr.mxu0 0.0
    %515 = vmatpush1.msra.mxu0 0.0
    %516 = vmatprep.subr.mxu0 0.0
    %517 = vmatpush1.msra.mxu0 0.0
    %518 = vmatprep.subr.mxu0 0.0
    %519 = vmatpush1.msra.mxu0 0.0
    %520 = vmatprep.subr.mxu0 0.0
    %521 = vmatpush1.msra.mxu0 0.0
    %522 = vmatprep.subr.mxu0 0.0
    %523 = vmatpush1.msra.mxu0 0.0
    %524 = vmatprep.subr.mxu0 0.0
    %v525 = vand.u32 %v38, 4294901760
    %526 = vmatpush1.msra.mxu0 %v525
    %527 = vmatprep.subr.mxu0 0.0
    %v528 = vand.u32 %v37, 4294901760
    %529 = vmatpush1.msra.mxu0 %v528
    %530 = vmatprep.subr.mxu0 0.0
    %v531 = vand.u32 %v36, 4294901760
    %532 = vmatpush1.msra.mxu0 %v531
    %533 = vmatprep.subr.mxu0 0.0
    %v534 = vand.u32 %v35, 4294901760
    %535 = vmatpush1.msra.mxu0 %v534
    %536 = vmatprep.subr.mxu0 0.0
    %v537 = vand.u32 %v34, 4294901760
    %538 = vmatpush1.msra.mxu0 %v537
    %539 = vmatprep.subr.mxu0 0.0
    %v540 = vand.u32 %v33, 4294901760
    %541 = vmatpush1.msra.mxu0 %v540
    %542 = vmatprep.subr.mxu0 0.0
    %v543 = vand.u32 %v32, 4294901760
    %544 = vmatpush1.msra.mxu0 %v543
    %545 = vmatprep.subr.mxu0 0.0
    %v546 = vand.u32 %v31, 4294901760
    %547 = vmatpush1.msra.mxu0 %v546
    %548 = vmatprep.subr.mxu0 0.0
    %549 = vmatpush2.msra.mxu0 0.0
    %550 = vmatprep.subr.mxu0 0.0
    %551 = vmatpush2.msra.mxu0 0.0
    %552 = vmatprep.subr.mxu0 0.0
    %553 = vmatpush2.msra.mxu0 0.0
    %554 = vmatprep.subr.mxu0 0.0
    %555 = vmatpush2.msra.mxu0 0.0
    %556 = vmatprep.subr.mxu0 0.0
    %557 = vmatpush2.msra.mxu0 0.0
    %558 = vmatprep.subr.mxu0 0.0
    %559 = vmatpush2.msra.mxu0 0.0
    %560 = vmatprep.subr.mxu0 0.0
    %561 = vmatpush2.msra.mxu0 0.0
    %562 = vmatprep.subr.mxu0 0.0
    %563 = vmatpush2.msra.mxu0 0.0
    %564 = vmatprep.subr.mxu0 0.0
    %565 = vmatpush2.msra.mxu0 0.0
    %566 = vmatprep.subr.mxu0 0.0
    %567 = vmatpush2.msra.mxu0 0.0
    %568 = vmatprep.subr.mxu0 0.0
    %569 = vmatpush2.msra.mxu0 0.0
    %570 = vmatprep.subr.mxu0 0.0
    %571 = vmatpush2.msra.mxu0 0.0
    %572 = vmatprep.subr.mxu0 0.0
    %573 = vmatpush2.msra.mxu0 0.0
    %574 = vmatprep.subr.mxu0 0.0
    %575 = vmatpush2.msra.mxu0 0.0
    %576 = vmatprep.subr.mxu0 0.0
    %577 = vmatpush2.msra.mxu0 0.0
    %578 = vmatprep.subr.mxu0 0.0
    %579 = vmatpush2.msra.mxu0 0.0
    %580 = vmatprep.mubr.f32.mxu0 0.0
    %v581 = vand.u32 %v48, 4294901760
    %582 = vmatmul.mubr.f32.gmra.mxu0 %v581
    %v583 = vpop.f32.mrf.mxu0
    %v584 = vadd.f32 %v505, %v583
    %v585 = vpop.f32.mrf.mxu0
    %586 = vdwg.mxu0
    %v587 = vrot.slane %v584, 4
    %v588 = vadd.f32 %v584, %v587
    %v589 = vrot.slane %v588, 2
    %v590 = vadd.f32 %v588, %v589
    %v591 = vrot.slane %v590, 1
    %v592 = vadd.f32 %v590, %v591
    %v593 = vrcp.pop 8.0
    %v594 = vmul.f32 %v592, %v593
    %v595 = vsub.f32 %v584, %v594
    %v596 = vmul.f32 %v595, %v595
    %v597 = vrot.slane %v596, 4
    %v598 = vadd.f32 %v596, %v597
    %v599 = vrot.slane %v598, 2
    %v600 = vadd.f32 %v598, %v599
    %v601 = vrot.slane %v600, 1
    %v602 = vadd.f32 %v600, %v601
    %v603 = vmul.f32 %v602, %v593
    %vm604 = vcmask 1040384
    %v605 = vsel %vm604, %v594, %v603
    %606 = vst [vmem:[%s9] sm:$0x3] %v605
    %v607 = vld [vmem:[%s3] sm:$0x1]
    %v608 = vld [vmem:[%s4] sm:$0x1]
    %v609 = vld [vmem:[%s5] sm:$0xff]
    %v610 = vld [vmem:[%s6] sm:$0xff]
    %v611 = vlaneseq
    %v612 = vand.u32 %v611, 127
    %vm613 = vcmp.lt.s32.totalorder %v612, 32
    %v614 = vsel %vm613, 0.0001, 0.001
    %v616 = vlaneseq
    %v617 = vshrl.u32 %v616, 7
    %v618 = vsub.s32 0, %v617
    %v619 = vrot.slane %v607, %v618
    %v621 = vmul.f32 %v619, %v595
    %v622 = vadd.f32 %v603, %v614
    %v623 = vrsqrt.pop %v622
    %v624 = vmul.f32 %v621, %v623
    %v626 = vlaneseq
    %v627 = vshrl.u32 %v626, 7
    %v628 = vsub.s32 0, %v627
    %v629 = vrot.slane %v608, %v628
    %v631 = vadd.f32 %v624, %v629
    %633 = vrot.lane.b32.xlu0 %v631, 96
    %v634 = vpop.permute.xlu0 %633
    %v636 = vmul.f32 %v634, 0.5
    %v637 = vmul.f32 %v636, 1.442695
    %v638 = vpow.pop %v637
    %v639 = vmul.f32 %v638, %v609
    %v640 = vadd.f32 %v631, %v639
    %vm641 = vcmp.ge.f32.partialorder %v610, 0.1
    %v642 = vsel %vm641, 1.1111112, 0.0
    %v643 = vmul.f32 %v640, %v642
    %v644 = vsel %vm613, %v643, -1e+30
    %645 = vmax.xlane.f32.xlu0 %v644
    %v646 = vpop.xlane.xlu0 %645
    %v647 = vsub.f32 %v644, %v646
    %v648 = vmul.f32 %v647, 1.442695
    %v649 = vpow.pop %v648
    %650 = vadd.xlane.f32.xlu0 %v649
    %v651 = vpop.xlane.xlu0 %650
    %v652 = vrcp.pop %v651
    %v653 = vmul.f32 %v649, %v652
    %v654 = vmul.f32 %v584, %v584
    %v655 = vmul.f32 %v654, 1.0655568
    %v656 = vmul.f32 %v584, 1.442695
    %v657 = vpow.pop %v656
    %v658 = vmul.f32 %v657, 1.0655568
    %v659 = vsub.f32 %v658, %v584
    %v660 = vsel %vm613, %v655, %v659
    %vm661 = vcmp.lt.s32.totalorder %v612, 64
    %v662 = vsel %vm661, %v660, 0.0
    %663 = vadd.xlane.f32.xlu0 %v662
    %v664 = vpop.xlane.xlu0 %663
    %v665 = vadd.f32 %v664, -2.0319166
    %v666 = vsub.f32 %v665, 32.0
    %v667 = vmul.f32 %v666, 0.5
    %668 = vst [vmem:[#allocation2] sm:$0xff] %v653
    %vm669 = vcmask 7168
    %670 = vst.msk [vmem:[%s8] sm:$0xff] %vm669, %v667
    // Predicated region
    $region30: #{logistic_gaussian_forward.3} parent=1 // pred_check
      _
    $region31: #{logistic_gaussian_forward.3} parent=1 // pred_check_branch
      %672 = sbr.rel (0) target = $region33
    $region32: #{logistic_gaussian_forward.3} parent=1 // pred_region
      %s674 = ssub.s32 128, 128
      %675 = vsyncadd [#allocation3], %s674
      %s677 = sshll.u32 [#allocation2], 4
      %s678 = int_to_ptr.vmem [resolvable:$true] %s677
      %680 = dma.vmem_to_hbm [thread:$0]  %s678, 128, %s7, [#allocation3]
    $region33: #{logistic_gaussian_forward.3} parent=1 // pred_fallthru
      _
    // Predicated region
    $region34: #{logistic_gaussian_forward.3} parent=1 // pred_check
      _
    $region35: #{logistic_gaussian_forward.3} parent=1 // pred_check_branch
      %682 = sbr.rel (0) target = $region37
    $region36: #{logistic_gaussian_forward.3} parent=1 // pred_region
      _
    $region37: #{logistic_gaussian_forward.3} parent=1 // pred_fallthru
      _
    // Predicated region
    $region38: #{logistic_gaussian_forward.3} parent=1 // pred_check
      _
    $region39: #{logistic_gaussian_forward.3} parent=1 // pred_check_branch
      %684 = sbr.rel (0) target = $region41
    $region40: #{logistic_gaussian_forward.3} parent=1 // pred_region
      _
    $region41: #{logistic_gaussian_forward.3} parent=1 // pred_fallthru
      _
    // Predicated region
    $region42: #{logistic_gaussian_forward.3} parent=1 // pred_check
      _
    $region43: #{logistic_gaussian_forward.3} parent=1 // pred_check_branch
      %686 = sbr.rel (0) target = $region45
    $region44: #{logistic_gaussian_forward.3} parent=1 // pred_region
      %687 = dma.done [#allocation3], 128
    $region45: #{logistic_gaussian_forward.3} parent=1 // pred_fallthru
      _
    // Predicated region
    $region46: #{logistic_gaussian_forward.3} parent=1 // pred_check
      _
    $region47: #{logistic_gaussian_forward.3} parent=1 // pred_check_branch
      %689 = sbr.rel (0) target = $region49
    $region48: #{logistic_gaussian_forward.3} parent=1 // pred_region
      _
    $region49: #{logistic_gaussian_forward.3} parent=1 // pred_fallthru
      _
    // Predicated region
    $region50: #{logistic_gaussian_forward.3} parent=1 // pred_check
      _
    $region51: #{logistic_gaussian_forward.3} parent=1 // pred_check_branch
      %691 = sbr.rel (0) target = $region53
    $region52: #{logistic_gaussian_forward.3} parent=1 // pred_region
      _
    $region53: #{logistic_gaussian_forward.3} parent=1 // pred_fallthru
      _
    %692 = vsyncpa [#allocation3], 1

</llo_original>
